<compile_context>
chip_gen: v7x
topology: tpu7x:2x2x1
jax: 0.10.0
libtpu: 0.0.40
codegen_flags: <defaults>
</compile_context>

<pallas_src>
import jax
import jax.numpy as jnp
from jax.experimental import pallas as pl
from jax.experimental.pallas import tpu as pltpu


def _naive_forecast_kernel(last_ref, o_ref):
    # last_ref: (TB, D_in)          last observed value of each feature series
    # o_ref:    (TB, T_out, D_out)  forecast output block
    last = last_ref[...].astype(jnp.float32)          # cast only the tiny tile
    d_in = last.shape[1]
    d_out = o_ref.shape[2]

    # Static feature mapping (out_idx -> in_idx = out_idx % d_in), no MXU:
    if d_out <= d_in:
        mapped = last[:, :d_out]                              # truncate
    else:
        reps = pl.cdiv(d_out, d_in)                           # trace-time int
        mapped = jnp.concatenate([last] * reps, axis=1)[:, :d_out]  # modulo-tile

    # Broadcast over the forecast horizon (sublane broadcast) and store.
    o_ref[...] = jnp.broadcast_to(mapped[:, None, :], o_ref.shape).astype(o_ref.dtype)


def arima_forward(x, input_dim, output_dim, output_length):
    """Pallas implementation of ARIMAModel.forward (naive-forecast path)."""
    # TODO(synk): ARIMA MLE fitting + pmdarima auto_arima order search are iterative
    # host-side algorithms (statsmodels) with no Pallas equivalent; only the module's
    # deterministic naive-forecast fallback + feature mapping are implemented here.
    B, L, D_in = x.shape
    assert D_in == input_dim

    # Only the last observed time step feeds the naive forecast.
    x_last = x[:, -1, :]                                      # (B, D_in), original dtype

    # Batch tiling: whole batch in one step when small, else 8 rows per step
    # (fills the 8 sublanes of a vreg; keeps a parallel grid axis for megacore).
    TB = B if B <= 8 else 8
    grid = (pl.cdiv(B, TB),)

    out_shape = jax.ShapeDtypeStruct((B, output_length, output_dim), jnp.float32)
    cost = pl.CostEstimate(
        flops=0,
        transcendentals=0,
        bytes_accessed=B * D_in * x_last.dtype.itemsize
        + B * output_length * output_dim * 4,
    )

    return pl.pallas_call(
        _naive_forecast_kernel,
        out_shape=out_shape,
        grid=grid,
        in_specs=[pl.BlockSpec((TB, D_in), lambda b: (b, 0))],
        out_specs=pl.BlockSpec((TB, output_length, output_dim), lambda b: (b, 0, 0)),
        compiler_params=pltpu.CompilerParams(dimension_semantics=("parallel",)),
        cost_estimate=cost,
    )(x_last)


def _reference(x, input_dim, output_dim, output_length):
    last = x[:, -1, :].astype(jnp.float32)                    # (B, D_in)
    in_idx = jnp.arange(output_dim) % input_dim
    B = x.shape[0]
    return jnp.broadcast_to(last[:, in_idx][:, None, :],
                            (B, output_length, output_dim)).astype(jnp.float32)


if __name__ == "__main__":
    # Small shapes consistent with the module's forward.
    batch = 2
    input_length = 16
    input_dim = 4
    output_length = 8

    key = jax.random.PRNGKey(0)
    x = jax.random.normal(key, (batch, input_length, input_dim), dtype=jnp.float32)

    # Case 1: output_dim > input_dim (exercises modulo feature replication).
    output_dim = 6
    out = jax.block_until_ready(arima_forward(x, input_dim, output_dim, output_length))
    ref = _reference(x, input_dim, output_dim, output_length)
    assert out.shape == (batch, output_length, output_dim)
    assert out.dtype == jnp.float32
    assert jnp.allclose(out, ref, atol=1e-6), "mismatch vs reference (output_dim > input_dim)"

    # Case 2: output_dim < input_dim (exercises truncation path).
    output_dim2 = 3
    out2 = jax.block_until_ready(arima_forward(x, input_dim, output_dim2, output_length))
    ref2 = _reference(x, input_dim, output_dim2, output_length)
    assert jnp.allclose(out2, ref2, atol=1e-6), "mismatch vs reference (output_dim < input_dim)"

    print("KERNEL_OK")
</pallas_src>

<mosaic_0001>
module attributes {stable_mosaic.version = 11 : i64} {
  func.func @_naive_forecast_kernel(%arg0: i32, %arg1: memref<2x4xf32, #tpu.memory_space<vmem>>, %arg2: memref<2x8x6xf32, #tpu.memory_space<vmem>>) attributes {dimension_semantics = [#tpu.dimension_semantics<parallel>], iteration_bounds = array<i64: 1>, scalar_prefetch = 0 : i64, scratch_operands = 0 : i64, tpu.core_type = #tpu.core_type<tc>, window_params = [{transform_indices = @transform_0, window_bounds = array<i64: 2, 4>}, {transform_indices = @transform_1, window_bounds = array<i64: 2, 8, 6>}]} {
    %c0 = arith.constant 0 : index
    %c0_0 = arith.constant 0 : index
    %0 = vector.load %arg1[%c0, %c0_0] : memref<2x4xf32, #tpu.memory_space<vmem>>, vector<2x4xf32>
    %1 = tpu.concatenate %0, %0 in 1 : vector<2x4xf32>, vector<2x4xf32> -> vector<2x8xf32>
    %2 = vector.extract_strided_slice %1 {offsets = [0, 0], sizes = [2, 6], strides = [1, 1]} : vector<2x8xf32> to vector<2x6xf32>
    %3 = vector.shape_cast %2 : vector<2x6xf32> to vector<2x1x6xf32>
    %4 = vector.shape_cast %3 : vector<2x1x6xf32> to vector<2x1x6xf32>
    %5 = vector.broadcast %4 : vector<2x1x6xf32> to vector<2x8x6xf32>
    %c0_1 = arith.constant 0 : index
    %c0_2 = arith.constant 0 : index
    %c0_3 = arith.constant 0 : index
    %6 = vector.load %arg2[%c0_1, %c0_2, %c0_3] : memref<2x8x6xf32, #tpu.memory_space<vmem>>, vector<2x8x6xf32>
    tpu.vector_store %arg2[%c0_1, %c0_2, %c0_3], %5 {strides = array<i32>} : memref<2x8x6xf32, #tpu.memory_space<vmem>>, vector<2x8x6xf32>,
    return
  }
  func.func @transform_0(%arg0: i32) -> (i32, i32) {
    %c0_i32 = arith.constant 0 : i32
    %c0_i32_0 = arith.constant 0 : i32
    return %arg0, %c0_i32 : i32, i32
  }
  func.func @transform_1(%arg0: i32) -> (i32, i32, i32) {
    %c0_i32 = arith.constant 0 : i32
    %c0_i32_0 = arith.constant 0 : i32
    %c0_i32_1 = arith.constant 0 : i32
    return %arg0, %c0_i32, %c0_i32_0 : i32, i32, i32
  }
}

</mosaic_0001>

<llo_original>
// kernel: tpu_custom_call.1
$region0: #{tpu_custom_call.1}
  #allocation0 [shape = 'u32[]', space=smem, size = 0x4, offset = 0x4, fixed_abs, tag = 'smem constant byte address 0x4 - core index']
  #allocation1 [shape = 'u32[144,128]{1,0:T(1,128)}', space=vmem, size = 0x12000, scoped, tag = 'internal scratch']
  %s0 = inlined_call_operand.hbm [shape: f32[2,4], index: 0, kind: input, shape index: {}]
  %s1 = inlined_call_operand.vmem [shape: f32[2,8,6], index: 1, kind: output, shape index: {}]
  %s2 = sld [smem:[#allocation0]]
  $region18: #{tpu_custom_call.1} parent=0
    _
  %s4 = ssub.s32 1, %s2
  %s5 = scalar_select 0, %s4, %s2
  $region1: #{tpu_custom_call.1} parent=0
    #allocation2 [shape = 'u8[1024]{0}', space=vmem, size = 0x400, scoped, tag = 'input window, operand 0, single buffered']
    #allocation3 [shape = 's32[1]{0}', space=sflag, size = 0x4, scoped, tag = 'scoped memory for tpu_custom_call.1']
    %6 = vsyncpa [#allocation3], 0
    // Predicated region
    $region2: #{tpu_custom_call.1} parent=1 // pred_check
      _
    $region3: #{tpu_custom_call.1} parent=1 // pred_check_branch
      %8 = sbr.rel (0) target = $region5
    $region4: #{tpu_custom_call.1} parent=1 // pred_region
      %s10 = ssub.s32 32, 32
      %11 = vsyncadd [#allocation3], %s10
      %s13 = sshll.u32 [#allocation2], 4
      %s14 = int_to_ptr.vmem [resolvable:$true] %s13
      %16 = dma.hbm_to_vmem [thread:$0]  %s0, 32, %s14, [#allocation3]
    $region5: #{tpu_custom_call.1} parent=1 // pred_fallthru
      _
    // Predicated region
    $region6: #{tpu_custom_call.1} parent=1 // pred_check
      _
    $region7: #{tpu_custom_call.1} parent=1 // pred_check_branch
      %18 = sbr.rel (0) target = $region9
    $region8: #{tpu_custom_call.1} parent=1 // pred_region
      %19 = dma.done [#allocation3], 32
    $region9: #{tpu_custom_call.1} parent=1 // pred_fallthru
      _
    %v20 = vld [vmem:[#allocation2] sm:$0x3]
    %22 = vrot.lane.b32.xlu0 %v20, 4
    %v23 = vpop.permute.xlu0 %22
    %vm25 = vcmask 31744
    %v26 = vsel %vm25, %v20, %v23
    %v29 = vunpack.c.l.s4 1966171168
    %v30 = vunpack.c.0.s8 %v29
    %v31 = vlaneseq
    %v32 = vshrl.u32 %v31, 7
    %v33 = vsub.s32 %v30, %v32
    %v34 = vrot.slane %v26, %v33
    %v35 = vcombine.high %v34, %v34
    %v37 = vunpack.c.l.s4 1966171168
    %v38 = vunpack.c.0.s8 %v37
    %v39 = vlaneseq
    %v40 = vshrl.u32 %v39, 7
    %v41 = vsub.s32 %v38, %v40
    %v42 = vrot.slane %v34, %v41
    %v44 = vunpack.c.l.s4 1966171168
    %v45 = vunpack.c.0.s8 %v44
    %v46 = vlaneseq
    %v47 = vshrl.u32 %v46, 7
    %v48 = vsub.s32 %v45, %v47
    %v49 = vrot.slane %v35, %v48
    %v50 = vlaneseq
    %v51 = vshrl.u32 %v50, 7
    %v52 = vsub.s32 0, %v51
    %v53 = vrot.slane %v42, %v52
    %v54 = vlaneseq
    %v55 = vshrl.u32 %v54, 7
    %v56 = vsub.s32 0, %v55
    %v57 = vrot.slane %v49, %v56
    %vm60 = vcmask 48128
    %61 = vst.msk [vmem:[%s1] sm:$0xff] %vm60, %v53
    %62 = vst.msk [vmem:[%s1 + $0x8] sm:$0xff] %vm60, %v57
    // Predicated region
    $region10: #{tpu_custom_call.1} parent=1 // pred_check
      _
    $region11: #{tpu_custom_call.1} parent=1 // pred_check_branch
      %64 = sbr.rel (0) target = $region13
    $region12: #{tpu_custom_call.1} parent=1 // pred_region
      _
    $region13: #{tpu_custom_call.1} parent=1 // pred_fallthru
      _
    // Predicated region
    $region14: #{tpu_custom_call.1} parent=1 // pred_check
      _
    $region15: #{tpu_custom_call.1} parent=1 // pred_check_branch
      %66 = sbr.rel (0) target = $region17
    $region16: #{tpu_custom_call.1} parent=1 // pred_region
      _
    $region17: #{tpu_custom_call.1} parent=1 // pred_fallthru
      _
    %67 = vsyncpa [#allocation3], 1

</llo_original>
